<compile_context>
chip_gen: v6e
topology: v6e:2x2x1
jax: 0.10.0
libtpu: 0.0.40
codegen_flags: <defaults>
</compile_context>

<pallas_src>
import functools

import jax
import jax.numpy as jnp
from jax.experimental import pallas as pl
from jax.experimental.pallas import tpu as pltpu


def _round_up(v, m):
    return (v + m - 1) // m * m


def _default_block_m():
    """Generation-aware batch tile: v6e (128 MiB VMEM, 2x256 MXU) likes 512,
    v5e (1 vst slot, 16 MiB scoped default) and v7x (64 MiB VMEM) like 256."""
    try:
        kind = jax.devices()[0].device_kind.lower()
    except Exception:  # pragma: no cover - defensive
        return 256
    if "v6" in kind or "trillium" in kind:
        return 512
    return 256


def _mlp_kernel(x_ref, w1_ref, b1_ref, w2_ref, b2_ref, w3_ref, b3_ref, o_ref):
    """Fused dropout(eval)=identity -> fc1+relu -> fc2+relu -> fc3 on one batch tile."""
    # TODO(synk): training-mode dropout (random mask + 1/(1-p) scaling) not
    # implemented; eval-mode dropout is the identity, which this reproduces.
    # Cast the input tile to bf16 in-kernel (rides otherwise-idle VPU slots)
    # instead of paying an extra HBM pass in the wrapper.
    x = x_ref[...].astype(w1_ref.dtype)

    # fc1 + ReLU : bf16 x bf16 -> f32 accumulate, bias/ReLU in f32 (VPU).
    h1 = jnp.dot(x, w1_ref[...], preferred_element_type=jnp.float32) + b1_ref[...]
    h1 = jnp.maximum(h1, 0.0)

    # fc2 + ReLU : cast LHS down to bf16 only for the MXU feed.
    h2 = jnp.dot(h1.astype(w2_ref.dtype), w2_ref[...],
                 preferred_element_type=jnp.float32) + b2_ref[...]
    h2 = jnp.maximum(h2, 0.0)

    # fc3 (no activation).
    out = jnp.dot(h2.astype(w3_ref.dtype), w3_ref[...],
                  preferred_element_type=jnp.float32) + b3_ref[...]
    o_ref[...] = out.astype(o_ref.dtype)


@functools.partial(jax.jit, static_argnames=("output_dim", "block_m"))
def _forward_jit(x, params, *, output_dim, block_m):
    w1, b1 = params["w1"], params["b1"]
    w2, b2 = params["w2"], params["b2"]
    w3, b3 = params["w3"], params["b3"]

    batch, d_in = x.shape
    d_h1 = w1.shape[1]
    d_h2 = w2.shape[1]
    d_out_p = w3.shape[1]

    # Fallback pad/cast only if the params were not prepared by init_params
    # (no-ops for properly initialized params, so nothing is emitted per call).
    pad_out = _round_up(d_out_p, 128) - d_out_p
    if pad_out:
        w3 = jnp.pad(w3, ((0, 0), (0, pad_out)))
        b3 = jnp.pad(b3, ((0, 0), (0, pad_out)))
        d_out_p += pad_out
    w1 = w1.astype(jnp.bfloat16)
    w2 = w2.astype(jnp.bfloat16)
    w3 = w3.astype(jnp.bfloat16)
    b1 = b1.astype(jnp.float32)
    b2 = b2.astype(jnp.float32)
    b3 = b3.astype(jnp.float32)

    # --- batch tiling -------------------------------------------------------
    if batch > block_m:
        bm = block_m
    elif batch > 16:
        # Split into >= 2 tiles so v7x's two TensorCores both get work and the
        # x DMA overlaps compute; keep bm a multiple of 16 (bf16 sublane pack).
        bm = _round_up(-(-batch // 2), 16)
    else:
        # Tiny batch: a second (all-padding) tile would be pure waste.
        bm = 16
    batch_p = _round_up(batch, bm)

    x_p = x
    if batch_p != batch:
        x_p = jnp.pad(x_p, ((0, batch_p - batch), (0, 0)))

    grid = (batch_p // bm,)

    # Grid-invariant operands: single-buffered (constant index_map -> the DMA
    # happens once; double-buffering them is pure VMEM waste).
    resident = pl.Buffered(1)
    in_specs = [
        pl.BlockSpec((bm, d_in), lambda i: (i, 0)),                              # x tile
        pl.BlockSpec((d_in, d_h1), lambda i: (0, 0), pipeline_mode=resident),    # W1
        pl.BlockSpec((1, d_h1), lambda i: (0, 0), pipeline_mode=resident),       # b1
        pl.BlockSpec((d_h1, d_h2), lambda i: (0, 0), pipeline_mode=resident),    # W2
        pl.BlockSpec((1, d_h2), lambda i: (0, 0), pipeline_mode=resident),       # b2
        pl.BlockSpec((d_h2, d_out_p), lambda i: (0, 0), pipeline_mode=resident), # W3
        pl.BlockSpec((1, d_out_p), lambda i: (0, 0), pipeline_mode=resident),    # b3
    ]
    out_specs = pl.BlockSpec((bm, d_out_p), lambda i: (i, 0))

    # --- explicit VMEM budget -------------------------------------------------
    x_itemsize = x.dtype.itemsize
    w_bytes = (w1.size + w2.size + w3.size) * 2            # bf16, single-buffered
    b_bytes = (b1.size + b2.size + b3.size) * 4            # f32 biases
    x_tile_bytes = 2 * bm * d_in * x_itemsize              # double-buffered input
    o_tile_bytes = 2 * bm * d_out_p * 4                    # double-buffered f32 out
    interm_bytes = bm * (d_h1 + d_h2 + d_out_p) * 4 + bm * (d_h1 + d_h2) * 2
    vmem_limit = int(1.25 * (w_bytes + b_bytes + x_tile_bytes + o_tile_bytes
                             + interm_bytes)) + (2 << 20)
    vmem_limit = min(max(vmem_limit, 16 << 20), 64 << 20)  # 64 MiB cap: safe on v7x

    flops = 2 * batch_p * (d_in * d_h1 + d_h1 * d_h2 + d_h2 * d_out_p)
    bytes_accessed = (
        batch_p * d_in * x_itemsize                         # native-dtype input
        + w_bytes + b_bytes
        + batch_p * d_out_p * 4                             # f32 output
    )

    # TODO(synk): for very large input_dim (>=4096) on v7x (64 MiB VMEM), tile
    # W1's K dimension with an inner pltpu.emit_pipeline + f32 VMEM accumulator
    # (keeps fc2/fc3 fused and weights single-resident) rather than adding an
    # outer K grid axis.
    # TODO(synk): optional v7x-only fp8 weight quantization (per-out-channel
    # scales folded into the bias add) for ~2x MXU throughput.
    out = pl.pallas_call(
        _mlp_kernel,
        out_shape=jax.ShapeDtypeStruct((batch_p, d_out_p), jnp.float32),
        grid_spec=pltpu.PrefetchScalarGridSpec(
            num_scalar_prefetch=0,
            grid=grid,
            in_specs=in_specs,
            out_specs=out_specs,
        ),
        compiler_params=pltpu.CompilerParams(
            dimension_semantics=("parallel",),
            vmem_limit_bytes=vmem_limit,
        ),
        cost_estimate=pl.CostEstimate(
            flops=flops, transcendentals=0, bytes_accessed=bytes_accessed
        ),
    )(x_p, w1, b1, w2, b2, w3, b3)

    if batch_p != batch or d_out_p != output_dim:
        out = out[:batch, :output_dim]
    return out


def contrastive_model_forward(x, params, *, output_dim, block_m=None):
    """x: [batch, input_dim] (any float dtype). Returns f32 [batch, output_dim]."""
    if block_m is None:
        block_m = _default_block_m()
    return _forward_jit(x, params, output_dim=output_dim, block_m=block_m)


def init_params(key, input_dim, output_dim):
    """Deterministic init mimicking nn.Linear's U(-1/sqrt(fan_in), 1/sqrt(fan_in)).

    Weights stored [in, out] (transpose of PyTorch's [out, in]) in bf16 for the
    MXU; biases f32. W3/b3 are pre-padded to a lane-dense multiple of 128 so the
    forward path never pads or slices lanes.
    """
    d_h1 = input_dim // 2
    d_h2 = input_dim // 4
    d_out_p = _round_up(output_dim, 128)
    keys = jax.random.split(key, 6)

    def lin(kw, kb, fan_in, fan_out, pad_to=None):
        bound = 1.0 / jnp.sqrt(fan_in)
        w = jax.random.uniform(kw, (fan_in, fan_out), jnp.float32, -bound, bound)
        b = jax.random.uniform(kb, (1, fan_out), jnp.float32, -bound, bound)
        if pad_to is not None and pad_to != fan_out:
            w = jnp.pad(w, ((0, 0), (0, pad_to - fan_out)))
            b = jnp.pad(b, ((0, 0), (0, pad_to - fan_out)))
        return w.astype(jnp.bfloat16), b.astype(jnp.float32)

    w1, b1 = lin(keys[0], keys[1], input_dim, d_h1)
    w2, b2 = lin(keys[2], keys[3], d_h1, d_h2)
    w3, b3 = lin(keys[4], keys[5], d_h2, output_dim, pad_to=d_out_p)
    return {"w1": w1, "b1": b1, "w2": w2, "b2": b2, "w3": w3, "b3": b3}


def reference_forward(x, params, output_dim):
    """Pure-JAX reference with the same bf16-operand / f32-accumulate recipe."""
    f32 = jnp.float32
    h1 = jnp.dot(x.astype(jnp.bfloat16), params["w1"], preferred_element_type=f32)
    h1 = jnp.maximum(h1 + params["b1"], 0.0)
    h2 = jnp.dot(h1.astype(jnp.bfloat16), params["w2"], preferred_element_type=f32)
    h2 = jnp.maximum(h2 + params["b2"], 0.0)
    out = jnp.dot(h2.astype(jnp.bfloat16), params["w3"],
                  preferred_element_type=f32) + params["b3"]
    return out[:, :output_dim]


if __name__ == "__main__":
    # Small shapes consistent with the module (scaled-down input_dim/output_dim).
    BATCH, INPUT_DIM, OUTPUT_DIM = 16, 512, 128

    key = jax.random.PRNGKey(0)
    k_x, k_p = jax.random.split(key)
    x = jax.random.normal(k_x, (BATCH, INPUT_DIM), jnp.float32)
    params = init_params(k_p, INPUT_DIM, OUTPUT_DIM)

    out = contrastive_model_forward(x, params, output_dim=OUTPUT_DIM)
    out = jax.block_until_ready(out)

    ref = reference_forward(x, params, OUTPUT_DIM)
    assert out.shape == (BATCH, OUTPUT_DIM)
    assert jnp.allclose(out, ref, atol=2e-2, rtol=2e-2), "mismatch vs JAX reference"

    print("KERNEL_OK")
</pallas_src>

<mosaic_0001>
module attributes {stable_mosaic.version = 11 : i64} {
  func.func @_mlp_kernel(%arg0: i32, %arg1: memref<16x512xf32, #tpu.memory_space<vmem>>, %arg2: memref<512x256xbf16, #tpu.memory_space<vmem>>, %arg3: memref<1x256xf32, #tpu.memory_space<vmem>>, %arg4: memref<256x128xbf16, #tpu.memory_space<vmem>>, %arg5: memref<1x128xf32, #tpu.memory_space<vmem>>, %arg6: memref<128x128xbf16, #tpu.memory_space<vmem>>, %arg7: memref<1x128xf32, #tpu.memory_space<vmem>>, %arg8: memref<16x128xf32, #tpu.memory_space<vmem>>) attributes {dimension_semantics = [#tpu.dimension_semantics<parallel>], iteration_bounds = array<i64: 1>, scalar_prefetch = 0 : i64, scratch_operands = 0 : i64, tpu.core_type = #tpu.core_type<tc>, window_params = [{transform_indices = @transform_0, window_bounds = array<i64: 16, 512>}, {pipeline_mode = #tpu.pipeline_mode<synchronous>, transform_indices = @transform_1, window_bounds = array<i64: 512, 256>}, {pipeline_mode = #tpu.pipeline_mode<synchronous>, transform_indices = @transform_2, window_bounds = array<i64: 1, 256>}, {pipeline_mode = #tpu.pipeline_mode<synchronous>, transform_indices = @transform_3, window_bounds = array<i64: 256, 128>}, {pipeline_mode = #tpu.pipeline_mode<synchronous>, transform_indices = @transform_4, window_bounds = array<i64: 1, 128>}, {pipeline_mode = #tpu.pipeline_mode<synchronous>, transform_indices = @transform_5, window_bounds = array<i64: 128, 128>}, {pipeline_mode = #tpu.pipeline_mode<synchronous>, transform_indices = @transform_6, window_bounds = array<i64: 1, 128>}, {transform_indices = @transform_7, window_bounds = array<i64: 16, 128>}]} {
    %c0 = arith.constant 0 : index
    %c0_0 = arith.constant 0 : index
    %0 = vector.load %arg1[%c0, %c0_0] : memref<16x512xf32, #tpu.memory_space<vmem>>, vector<16x512xf32>
    %1 = arith.truncf %0 : vector<16x512xf32> to vector<16x512xbf16>
    %c0_1 = arith.constant 0 : index
    %c0_2 = arith.constant 0 : index
    %2 = vector.load %arg2[%c0_1, %c0_2] : memref<512x256xbf16, #tpu.memory_space<vmem>>, vector<512x256xbf16>
    %cst = arith.constant dense<0.000000e+00> : vector<16x256xf32>
    %3 = tpu.matmul %1, %2, %cst {dimension_numbers = #tpu.dot_dimension_numbers<[1], [0], [0], [1], [0, 0, 1, 1], [], []>} : vector<16x512xbf16>, vector<512x256xbf16>, vector<16x256xf32> -> vector<16x256xf32>
    %c0_3 = arith.constant 0 : index
    %c0_4 = arith.constant 0 : index
    %4 = vector.load %arg3[%c0_3, %c0_4] : memref<1x256xf32, #tpu.memory_space<vmem>>, vector<1x256xf32>
    %5 = vector.broadcast %4 : vector<1x256xf32> to vector<16x256xf32>
    %6 = arith.addf %3, %5 : vector<16x256xf32>
    %cst_5 = arith.constant 0.000000e+00 : f32
    %7 = vector.broadcast %cst_5 : f32 to vector<16x256xf32>
    %8 = arith.maximumf %6, %7 : vector<16x256xf32>
    %9 = arith.truncf %8 : vector<16x256xf32> to vector<16x256xbf16>
    %c0_6 = arith.constant 0 : index
    %c0_7 = arith.constant 0 : index
    %10 = vector.load %arg4[%c0_6, %c0_7] : memref<256x128xbf16, #tpu.memory_space<vmem>>, vector<256x128xbf16>
    %cst_8 = arith.constant dense<0.000000e+00> : vector<16x128xf32>
    %11 = tpu.matmul %9, %10, %cst_8 {dimension_numbers = #tpu.dot_dimension_numbers<[1], [0], [0], [1], [0, 0, 1, 1], [], []>} : vector<16x256xbf16>, vector<256x128xbf16>, vector<16x128xf32> -> vector<16x128xf32>
    %c0_9 = arith.constant 0 : index
    %c0_10 = arith.constant 0 : index
    %12 = vector.load %arg5[%c0_9, %c0_10] : memref<1x128xf32, #tpu.memory_space<vmem>>, vector<1x128xf32>
    %13 = vector.broadcast %12 : vector<1x128xf32> to vector<16x128xf32>
    %14 = arith.addf %11, %13 : vector<16x128xf32>
    %cst_11 = arith.constant 0.000000e+00 : f32
    %15 = vector.broadcast %cst_11 : f32 to vector<16x128xf32>
    %16 = arith.maximumf %14, %15 : vector<16x128xf32>
    %17 = arith.truncf %16 : vector<16x128xf32> to vector<16x128xbf16>
    %c0_12 = arith.constant 0 : index
    %c0_13 = arith.constant 0 : index
    %18 = vector.load %arg6[%c0_12, %c0_13] : memref<128x128xbf16, #tpu.memory_space<vmem>>, vector<128x128xbf16>
    %cst_14 = arith.constant dense<0.000000e+00> : vector<16x128xf32>
    %19 = tpu.matmul %17, %18, %cst_14 {dimension_numbers = #tpu.dot_dimension_numbers<[1], [0], [0], [1], [0, 0, 1, 1], [], []>} : vector<16x128xbf16>, vector<128x128xbf16>, vector<16x128xf32> -> vector<16x128xf32>
    %c0_15 = arith.constant 0 : index
    %c0_16 = arith.constant 0 : index
    %20 = vector.load %arg7[%c0_15, %c0_16] : memref<1x128xf32, #tpu.memory_space<vmem>>, vector<1x128xf32>
    %21 = vector.broadcast %20 : vector<1x128xf32> to vector<16x128xf32>
    %22 = arith.addf %19, %21 : vector<16x128xf32>
    %c0_17 = arith.constant 0 : index
    %c0_18 = arith.constant 0 : index
    %23 = vector.load %arg8[%c0_17, %c0_18] : memref<16x128xf32, #tpu.memory_space<vmem>>, vector<16x128xf32>
    tpu.vector_store %arg8[%c0_17, %c0_18], %22 {strides = array<i32>} : memref<16x128xf32, #tpu.memory_space<vmem>>, vector<16x128xf32>,
    return
  }
  func.func @transform_0(%arg0: i32) -> (i32, i32) {
    %c0_i32 = arith.constant 0 : i32
    %c0_i32_0 = arith.constant 0 : i32
    return %arg0, %c0_i32 : i32, i32
  }
  func.func @transform_1(%arg0: i32) -> (i32, i32) {
    %c0_i32 = arith.constant 0 : i32
    %c0_i32_0 = arith.constant 0 : i32
    %c0_i32_1 = arith.constant 0 : i32
    return %c0_i32, %c0_i32_0 : i32, i32
  }
  func.func @transform_2(%arg0: i32) -> (i32, i32) {
    %c0_i32 = arith.constant 0 : i32
    %c0_i32_0 = arith.constant 0 : i32
    %c0_i32_1 = arith.constant 0 : i32
    return %c0_i32, %c0_i32_0 : i32, i32
  }
  func.func @transform_3(%arg0: i32) -> (i32, i32) {
    %c0_i32 = arith.constant 0 : i32
    %c0_i32_0 = arith.constant 0 : i32
    %c0_i32_1 = arith.constant 0 : i32
    return %c0_i32, %c0_i32_0 : i32, i32
  }
  func.func @transform_4(%arg0: i32) -> (i32, i32) {
    %c0_i32 = arith.constant 0 : i32
    %c0_i32_0 = arith.constant 0 : i32
    %c0_i32_1 = arith.constant 0 : i32
    return %c0_i32, %c0_i32_0 : i32, i32
  }
  func.func @transform_5(%arg0: i32) -> (i32, i32) {
    %c0_i32 = arith.constant 0 : i32
    %c0_i32_0 = arith.constant 0 : i32
    %c0_i32_1 = arith.constant 0 : i32
    return %c0_i32, %c0_i32_0 : i32, i32
  }
  func.func @transform_6(%arg0: i32) -> (i32, i32) {
    %c0_i32 = arith.constant 0 : i32
    %c0_i32_0 = arith.constant 0 : i32
    %c0_i32_1 = arith.constant 0 : i32
    return %c0_i32, %c0_i32_0 : i32, i32
  }
  func.func @transform_7(%arg0: i32) -> (i32, i32) {
    %c0_i32 = arith.constant 0 : i32
    %c0_i32_0 = arith.constant 0 : i32
    return %arg0, %c0_i32 : i32, i32
  }
}

</mosaic_0001>

<llo_original>
// kernel: _forward_jit.1
$region0: #{_forward_jit.1}
  #allocation0 [shape = 'u32[]', space=smem, size = 0x4, offset = 0x4, fixed_abs, tag = 'smem constant byte address 0x4 - core index']
  #allocation1 [shape = 'u32[144,128]{1,0:T(1,128)}', space=vmem, size = 0x12000, scoped, tag = 'internal scratch']
  %s0 = inlined_call_operand.hbm [shape: f32[16,512], index: 0, kind: input, shape index: {}]
  %s1 = inlined_call_operand.hbm [shape: bf16[512,256], index: 1, kind: input, shape index: {}]
  %s2 = inlined_call_operand.hbm [shape: f32[1,256], index: 2, kind: input, shape index: {}]
  %s3 = inlined_call_operand.hbm [shape: bf16[256,128], index: 3, kind: input, shape index: {}]
  %s4 = inlined_call_operand.vmem [shape: f32[1,128], index: 4, kind: input, shape index: {}]
  %s5 = inlined_call_operand.hbm [shape: bf16[128,128], index: 5, kind: input, shape index: {}]
  %s6 = inlined_call_operand.vmem [shape: f32[1,128], index: 6, kind: input, shape index: {}]
  %s7 = inlined_call_operand.hbm [shape: f32[16,128], index: 7, kind: output, shape index: {}]
  %s8 = sld [smem:[#allocation0]]
  $region58: #{_forward_jit.1} parent=0
    _
  %s10 = ssub.s32 1, %s8
  %s11 = scalar_select 0, %s10, %s8
  $region1: #{_forward_jit.1} parent=0
    #allocation2 [shape = 'u8[32768]{0}', space=vmem, size = 0x8000, scoped, tag = 'input window, operand 0, single buffered']
    #allocation3 [shape = 's32[1]{0}', space=sflag, size = 0x4, scoped, tag = 'scoped memory for _forward_jit.1']
    #allocation4 [shape = 's32[1]{0}', space=sflag, size = 0x4, scoped, tag = 'scoped memory for _forward_jit.1']
    #allocation5 [shape = 'u8[262144]{0}', space=vmem, size = 0x40000, scoped, tag = 'input window, operand 1, single buffered']
    #allocation6 [shape = 's32[1]{0}', space=sflag, size = 0x4, scoped, tag = 'scoped memory for _forward_jit.1']
    #allocation7 [shape = 'u8[1024]{0}', space=vmem, size = 0x400, scoped, tag = 'input window, operand 2, single buffered']
    #allocation8 [shape = 'u8[65536]{0}', space=vmem, size = 0x10000, scoped, tag = 'input window, operand 3, single buffered']
    #allocation9 [shape = 's32[1]{0}', space=sflag, size = 0x4, scoped, tag = 'scoped memory for _forward_jit.1']
    #allocation10 [shape = 'u8[32768]{0}', space=vmem, size = 0x8000, scoped, tag = 'input window, operand 5, single buffered']
    #allocation11 [shape = 'u8[8192]{0}', space=vmem, size = 0x2000, scoped, tag = 'output window, operand 0, single buffered']
    %12 = vsyncpa [#allocation3], 0
    %13 = vsyncpa [#allocation6], 0
    %14 = vsyncpa [#allocation9], 0
    %15 = vsyncpa [#allocation4], 0
    // Predicated region
    $region2: #{_forward_jit.1} parent=1 // pred_check
      _
    $region3: #{_forward_jit.1} parent=1 // pred_check_branch
      %17 = sbr.rel (0) target = $region5
    $region4: #{_forward_jit.1} parent=1 // pred_region
      %s19 = ssub.s32 1024, 1024
      %20 = vsyncadd [#allocation3], %s19
      %s21 = sshll.u32 [#allocation2], 4
      %s22 = int_to_ptr.vmem [resolvable:$true] %s21
      %27 = dma.hbm_to_vmem [thread:$0]  %s0, 1024, %s22, [#allocation3], 512, 512, 32
    $region5: #{_forward_jit.1} parent=1 // pred_fallthru
      _
    // Predicated region
    $region6: #{_forward_jit.1} parent=1 // pred_check
      _
    $region7: #{_forward_jit.1} parent=1 // pred_check_branch
      %29 = sbr.rel (0) target = $region9
    $region8: #{_forward_jit.1} parent=1 // pred_region
      %s31 = ssub.s32 8192, 8192
      %32 = vsyncadd [#allocation6], %s31
      %s33 = sshll.u32 [#allocation5], 4
      %s34 = int_to_ptr.vmem [resolvable:$true] %s33
      %39 = dma.hbm_to_vmem [thread:$0]  %s1, 8192, %s34, [#allocation6], 128, 128, 8
    $region9: #{_forward_jit.1} parent=1 // pred_fallthru
      _
    // Predicated region
    $region10: #{_forward_jit.1} parent=1 // pred_check
      _
    $region11: #{_forward_jit.1} parent=1 // pred_check_branch
      %41 = sbr.rel (0) target = $region13
    $region12: #{_forward_jit.1} parent=1 // pred_region
      %s43 = ssub.s32 32, 32
      %44 = vsyncadd [#allocation6], %s43
      %s46 = sshll.u32 [#allocation7], 4
      %s47 = int_to_ptr.vmem [resolvable:$true] %s46
      %49 = dma.hbm_to_vmem [thread:$0]  %s2, 32, %s47, [#allocation6]
    $region13: #{_forward_jit.1} parent=1 // pred_fallthru
      _
    // Predicated region
    $region14: #{_forward_jit.1} parent=1 // pred_check
      _
    $region15: #{_forward_jit.1} parent=1 // pred_check_branch
      %51 = sbr.rel (0) target = $region17
    $region16: #{_forward_jit.1} parent=1 // pred_region
      %s53 = ssub.s32 2048, 2048
      %54 = vsyncadd [#allocation9], %s53
      %s55 = sshll.u32 [#allocation8], 4
      %s56 = int_to_ptr.vmem [resolvable:$true] %s55
      %61 = dma.hbm_to_vmem [thread:$0]  %s3, 2048, %s56, [#allocation9], 64, 64, 4
    $region17: #{_forward_jit.1} parent=1 // pred_fallthru
      _
    // Predicated region
    $region18: #{_forward_jit.1} parent=1 // pred_check
      _
    $region19: #{_forward_jit.1} parent=1 // pred_check_branch
      %63 = sbr.rel (0) target = $region21
    $region20: #{_forward_jit.1} parent=1 // pred_region
      _
    $region21: #{_forward_jit.1} parent=1 // pred_fallthru
      _
    // Predicated region
    $region22: #{_forward_jit.1} parent=1 // pred_check
      _
    $region23: #{_forward_jit.1} parent=1 // pred_check_branch
      %65 = sbr.rel (0) target = $region25
    $region24: #{_forward_jit.1} parent=1 // pred_region
      %s67 = ssub.s32 1024, 1024
      %68 = vsyncadd [#allocation9], %s67
      %s69 = sshll.u32 [#allocation10], 4
      %s70 = int_to_ptr.vmem [resolvable:$true] %s69
      %75 = dma.hbm_to_vmem [thread:$0]  %s5, 1024, %s70, [#allocation9], 64, 64, 4
    $region25: #{_forward_jit.1} parent=1 // pred_fallthru
      _
    // Predicated region
    $region26: #{_forward_jit.1} parent=1 // pred_check
      _
    $region27: #{_forward_jit.1} parent=1 // pred_check_branch
      %77 = sbr.rel (0) target = $region29
    $region28: #{_forward_jit.1} parent=1 // pred_region
      _
    $region29: #{_forward_jit.1} parent=1 // pred_fallthru
      _
    // Predicated region
    $region30: #{_forward_jit.1} parent=1 // pred_check
      _
    $region31: #{_forward_jit.1} parent=1 // pred_check_branch
      %79 = sbr.rel (0) target = $region33
    $region32: #{_forward_jit.1} parent=1 // pred_region
      %80 = dma.done [#allocation3], 1024
    $region33: #{_forward_jit.1} parent=1 // pred_fallthru
      _
    // Predicated region
    $region34: #{_forward_jit.1} parent=1 // pred_check
      _
    $region35: #{_forward_jit.1} parent=1 // pred_check_branch
      %82 = sbr.rel (0) target = $region37
    $region36: #{_forward_jit.1} parent=1 // pred_region
      %83 = dma.done [#allocation6], 8192
    $region37: #{_forward_jit.1} parent=1 // pred_fallthru
      _
    // Predicated region
    $region38: #{_forward_jit.1} parent=1 // pred_check
      _
    $region39: #{_forward_jit.1} parent=1 // pred_check_branch
      %85 = sbr.rel (0) target = $region41
    $region40: #{_forward_jit.1} parent=1 // pred_region
      %86 = dma.done [#allocation6], 32
    $region41: #{_forward_jit.1} parent=1 // pred_fallthru
      _
    // Predicated region
    $region42: #{_forward_jit.1} parent=1 // pred_check
      _
    $region43: #{_forward_jit.1} parent=1 // pred_check_branch
      %88 = sbr.rel (0) target = $region45
    $region44: #{_forward_jit.1} parent=1 // pred_region
      %89 = dma.done [#allocation9], 2048
    $region45: #{_forward_jit.1} parent=1 // pred_fallthru
      _
    // Predicated region
    $region46: #{_forward_jit.1} parent=1 // pred_check
      _
    $region47: #{_forward_jit.1} parent=1 // pred_check_branch
      %91 = sbr.rel (0) target = $region49
    $region48: #{_forward_jit.1} parent=1 // pred_region
      %92 = dma.done [#allocation9], 1024
    $region49: #{_forward_jit.1} parent=1 // pred_fallthru
      _
    %v94 = vld [vmem:[#allocation2] sm:$0xff]
    %v95 = vld [vmem:[#allocation2 + $0x8] sm:$0xff]
    %v96 = vld [vmem:[#allocation2 + $0x10] sm:$0xff]
    %v97 = vld [vmem:[#allocation2 + $0x18] sm:$0xff]
    %v98 = vld [vmem:[#allocation2 + $0x20] sm:$0xff]
    %v99 = vld [vmem:[#allocation2 + $0x28] sm:$0xff]
    %v100 = vld [vmem:[#allocation2 + $0x30] sm:$0xff]
    %v101 = vld [vmem:[#allocation2 + $0x38] sm:$0xff]
    %v102 = vpack.c.bf16 %v98, %v94
    %v103 = vpack.c.bf16 %v99, %v95
    %v104 = vpack.c.bf16 %v100, %v96
    %v105 = vpack.c.bf16 %v101, %v97
    %v106 = vld [vmem:[#allocation5] sm:$0xff]
    %v107 = vld [vmem:[#allocation5 + $0x8] sm:$0xff]
    %v108 = vld [vmem:[#allocation5 + $0x10] sm:$0xff]
    %v109 = vld [vmem:[#allocation5 + $0x18] sm:$0xff]
    %v110 = vld [vmem:[#allocation5 + $0x20] sm:$0xff]
    %v111 = vld [vmem:[#allocation5 + $0x28] sm:$0xff]
    %v112 = vld [vmem:[#allocation5 + $0x30] sm:$0xff]
    %v113 = vld [vmem:[#allocation5 + $0x38] sm:$0xff]
    %v114 = vld [vmem:[#allocation5 + $0x40] sm:$0xff]
    %v115 = vld [vmem:[#allocation5 + $0x48] sm:$0xff]
    %v116 = vld [vmem:[#allocation5 + $0x50] sm:$0xff]
    %v117 = vld [vmem:[#allocation5 + $0x58] sm:$0xff]
    %v118 = vld [vmem:[#allocation5 + $0x60] sm:$0xff]
    %v119 = vld [vmem:[#allocation5 + $0x68] sm:$0xff]
    %v120 = vld [vmem:[#allocation5 + $0x70] sm:$0xff]
    %v121 = vld [vmem:[#allocation5 + $0x78] sm:$0xff]
    %v122 = vld [vmem:[#allocation5 + $0x80] sm:$0xff]
    %v123 = vld [vmem:[#allocation5 + $0x88] sm:$0xff]
    %v124 = vld [vmem:[#allocation5 + $0x90] sm:$0xff]
    %v125 = vld [vmem:[#allocation5 + $0x98] sm:$0xff]
    %v126 = vld [vmem:[#allocation5 + $0xa0] sm:$0xff]
    %v127 = vld [vmem:[#allocation5 + $0xa8] sm:$0xff]
    %v128 = vld [vmem:[#allocation5 + $0xb0] sm:$0xff]
    %v129 = vld [vmem:[#allocation5 + $0xb8] sm:$0xff]
    %v130 = vld [vmem:[#allocation5 + $0xc0] sm:$0xff]
    %v131 = vld [vmem:[#allocation5 + $0xc8] sm:$0xff]
    %v132 = vld [vmem:[#allocation5 + $0xd0] sm:$0xff]
    %v133 = vld [vmem:[#allocation5 + $0xd8] sm:$0xff]
    %v134 = vld [vmem:[#allocation5 + $0xe0] sm:$0xff]
    %v135 = vld [vmem:[#allocation5 + $0xe8] sm:$0xff]
    %v136 = vld [vmem:[#allocation5 + $0xf0] sm:$0xff]
    %v137 = vld [vmem:[#allocation5 + $0xf8] sm:$0xff]
    %v138 = vld [vmem:[#allocation5 + $0x100] sm:$0xff]
    %v139 = vld [vmem:[#allocation5 + $0x108] sm:$0xff]
    %v140 = vld [vmem:[#allocation5 + $0x110] sm:$0xff]
    %v141 = vld [vmem:[#allocation5 + $0x118] sm:$0xff]
    %v142 = vld [vmem:[#allocation5 + $0x120] sm:$0xff]
    %v143 = vld [vmem:[#allocation5 + $0x128] sm:$0xff]
    %v144 = vld [vmem:[#allocation5 + $0x130] sm:$0xff]
    %v145 = vld [vmem:[#allocation5 + $0x138] sm:$0xff]
    %v146 = vld [vmem:[#allocation5 + $0x140] sm:$0xff]
    %v147 = vld [vmem:[#allocation5 + $0x148] sm:$0xff]
    %v148 = vld [vmem:[#allocation5 + $0x150] sm:$0xff]
    %v149 = vld [vmem:[#allocation5 + $0x158] sm:$0xff]
    %v150 = vld [vmem:[#allocation5 + $0x160] sm:$0xff]
    %v151 = vld [vmem:[#allocation5 + $0x168] sm:$0xff]
    %v152 = vld [vmem:[#allocation5 + $0x170] sm:$0xff]
    %v153 = vld [vmem:[#allocation5 + $0x178] sm:$0xff]
    %v154 = vld [vmem:[#allocation5 + $0x180] sm:$0xff]
    %v155 = vld [vmem:[#allocation5 + $0x188] sm:$0xff]
    %v156 = vld [vmem:[#allocation5 + $0x190] sm:$0xff]
    %v157 = vld [vmem:[#allocation5 + $0x198] sm:$0xff]
    %v158 = vld [vmem:[#allocation5 + $0x1a0] sm:$0xff]
    %v159 = vld [vmem:[#allocation5 + $0x1a8] sm:$0xff]
    %v160 = vld [vmem:[#allocation5 + $0x1b0] sm:$0xff]
    %v161 = vld [vmem:[#allocation5 + $0x1b8] sm:$0xff]
    %v162 = vld [vmem:[#allocation5 + $0x1c0] sm:$0xff]
    %v163 = vld [vmem:[#allocation5 + $0x1c8] sm:$0xff]
    %v164 = vld [vmem:[#allocation5 + $0x1d0] sm:$0xff]
    %v165 = vld [vmem:[#allocation5 + $0x1d8] sm:$0xff]
    %v166 = vld [vmem:[#allocation5 + $0x1e0] sm:$0xff]
    %v167 = vld [vmem:[#allocation5 + $0x1e8] sm:$0xff]
    %v168 = vld [vmem:[#allocation5 + $0x1f0] sm:$0xff]
    %v169 = vld [vmem:[#allocation5 + $0x1f8] sm:$0xff]
    %v170 = vld [vmem:[#allocation7] sm:$0x3]
    %v172 = vlaneseq
    %v173 = vshrl.u32 %v172, 7
    %v174 = vsub.s32 0, %v173
    %v175 = vrot.slane %v170, %v174
    %v176 = vlaneseq
    %v177 = vshrl.u32 %v176, 7
    %v178 = vsub.s32 1, %v177
    %v179 = vrot.slane %v170, %v178
    %v246 = vunpack.c.l.b16 %v106
    %v247 = vunpack.c.h.b16 %v106
    %v248 = vunpack.c.l.b16 %v107
    %v249 = vunpack.c.h.b16 %v107
    %v250 = vunpack.c.l.b16 %v108
    %v251 = vunpack.c.h.b16 %v108
    %v252 = vunpack.c.l.b16 %v109
    %v253 = vunpack.c.h.b16 %v109
    %v254 = vunpack.c.l.b16 %v110
    %v255 = vunpack.c.h.b16 %v110
    %v256 = vunpack.c.l.b16 %v111
    %v257 = vunpack.c.h.b16 %v111
    %v258 = vunpack.c.l.b16 %v112
    %v259 = vunpack.c.h.b16 %v112
    %v260 = vunpack.c.l.b16 %v113
    %v261 = vunpack.c.h.b16 %v113
    %v262 = vunpack.c.l.b16 %v114
    %v263 = vunpack.c.h.b16 %v114
    %v264 = vunpack.c.l.b16 %v115
    %v265 = vunpack.c.h.b16 %v115
    %v266 = vunpack.c.l.b16 %v116
    %v267 = vunpack.c.h.b16 %v116
    %v268 = vunpack.c.l.b16 %v117
    %v269 = vunpack.c.h.b16 %v117
    %v270 = vunpack.c.l.b16 %v118
    %v271 = vunpack.c.h.b16 %v118
    %v272 = vunpack.c.l.b16 %v119
    %v273 = vunpack.c.h.b16 %v119
    %v274 = vunpack.c.l.b16 %v120
    %v275 = vunpack.c.h.b16 %v120
    %v276 = vunpack.c.l.b16 %v121
    %v277 = vunpack.c.h.b16 %v121
    %v278 = vunpack.c.l.b16 %v122
    %v279 = vunpack.c.h.b16 %v122
    %v280 = vunpack.c.l.b16 %v123
    %v281 = vunpack.c.h.b16 %v123
    %v282 = vunpack.c.l.b16 %v124
    %v283 = vunpack.c.h.b16 %v124
    %v284 = vunpack.c.l.b16 %v125
    %v285 = vunpack.c.h.b16 %v125
    %v286 = vunpack.c.l.b16 %v126
    %v287 = vunpack.c.h.b16 %v126
    %v288 = vunpack.c.l.b16 %v127
    %v289 = vunpack.c.h.b16 %v127
    %v290 = vunpack.c.l.b16 %v128
    %v291 = vunpack.c.h.b16 %v128
    %v292 = vunpack.c.l.b16 %v129
    %v293 = vunpack.c.h.b16 %v129
    %v294 = vunpack.c.l.b16 %v130
    %v295 = vunpack.c.h.b16 %v130
    %v296 = vunpack.c.l.b16 %v131
    %v297 = vunpack.c.h.b16 %v131
    %v298 = vunpack.c.l.b16 %v132
    %v299 = vunpack.c.h.b16 %v132
    %v300 = vunpack.c.l.b16 %v133
    %v301 = vunpack.c.h.b16 %v133
    %v302 = vunpack.c.l.b16 %v134
    %v303 = vunpack.c.h.b16 %v134
    %v304 = vunpack.c.l.b16 %v135
    %v305 = vunpack.c.h.b16 %v135
    %v306 = vunpack.c.l.b16 %v136
    %v307 = vunpack.c.h.b16 %v136
    %v308 = vunpack.c.l.b16 %v137
    %v309 = vunpack.c.h.b16 %v137
    %v310 = vunpack.c.l.b16 %v138
    %v311 = vunpack.c.h.b16 %v138
    %v312 = vunpack.c.l.b16 %v139
    %v313 = vunpack.c.h.b16 %v139
    %v314 = vunpack.c.l.b16 %v140
    %v315 = vunpack.c.h.b16 %v140
    %v316 = vunpack.c.l.b16 %v141
    %v317 = vunpack.c.h.b16 %v141
    %v318 = vunpack.c.l.b16 %v142
    %v319 = vunpack.c.h.b16 %v142
    %v320 = vunpack.c.l.b16 %v143
    %v321 = vunpack.c.h.b16 %v143
    %v322 = vunpack.c.l.b16 %v144
    %v323 = vunpack.c.h.b16 %v144
    %v324 = vunpack.c.l.b16 %v145
    %v325 = vunpack.c.h.b16 %v145
    %v326 = vunpack.c.l.b16 %v146
    %v327 = vunpack.c.h.b16 %v146
    %v328 = vunpack.c.l.b16 %v147
    %v329 = vunpack.c.h.b16 %v147
    %v330 = vunpack.c.l.b16 %v148
    %v331 = vunpack.c.h.b16 %v148
    %v332 = vunpack.c.l.b16 %v149
    %v333 = vunpack.c.h.b16 %v149
    %v334 = vunpack.c.l.b16 %v150
    %v335 = vunpack.c.h.b16 %v150
    %v336 = vunpack.c.l.b16 %v151
    %v337 = vunpack.c.h.b16 %v151
    %v338 = vunpack.c.l.b16 %v152
    %v339 = vunpack.c.h.b16 %v152
    %v340 = vunpack.c.l.b16 %v153
    %v341 = vunpack.c.h.b16 %v153
    %v342 = vunpack.c.l.b16 %v154
    %v343 = vunpack.c.h.b16 %v154
    %v344 = vunpack.c.l.b16 %v155
    %v345 = vunpack.c.h.b16 %v155
    %v346 = vunpack.c.l.b16 %v156
    %v347 = vunpack.c.h.b16 %v156
    %v348 = vunpack.c.l.b16 %v157
    %v349 = vunpack.c.h.b16 %v157
    %v350 = vunpack.c.l.b16 %v158
    %v351 = vunpack.c.h.b16 %v158
    %v352 = vunpack.c.l.b16 %v159
    %v353 = vunpack.c.h.b16 %v159
    %v354 = vunpack.c.l.b16 %v160
    %v355 = vunpack.c.h.b16 %v160
    %v356 = vunpack.c.l.b16 %v161
    %v357 = vunpack.c.h.b16 %v161
    %v358 = vunpack.c.l.b16 %v162
    %v359 = vunpack.c.h.b16 %v162
    %v360 = vunpack.c.l.b16 %v163
    %v361 = vunpack.c.h.b16 %v163
    %v362 = vunpack.c.l.b16 %v164
    %v363 = vunpack.c.h.b16 %v164
    %v364 = vunpack.c.l.b16 %v165
    %v365 = vunpack.c.h.b16 %v165
    %v366 = vunpack.c.l.b16 %v166
    %v367 = vunpack.c.h.b16 %v166
    %v368 = vunpack.c.l.b16 %v167
    %v369 = vunpack.c.h.b16 %v167
    %v370 = vunpack.c.l.b16 %v168
    %v371 = vunpack.c.h.b16 %v168
    %v372 = vunpack.c.l.b16 %v169
    %v373 = vunpack.c.h.b16 %v169
    %v374 = vpack.c.b16 %v248, %v246
    %v375 = vpack.c.b16 %v249, %v247
    %v376 = vpack.c.b16 %v252, %v250
    %v377 = vpack.c.b16 %v253, %v251
    %v378 = vpack.c.b16 %v256, %v254
    %v379 = vpack.c.b16 %v257, %v255
    %v380 = vpack.c.b16 %v260, %v258
    %v381 = vpack.c.b16 %v261, %v259
    %v382 = vpack.c.b16 %v264, %v262
    %v383 = vpack.c.b16 %v265, %v263
    %v384 = vpack.c.b16 %v268, %v266
    %v385 = vpack.c.b16 %v269, %v267
    %v386 = vpack.c.b16 %v272, %v270
    %v387 = vpack.c.b16 %v273, %v271
    %v388 = vpack.c.b16 %v276, %v274
    %v389 = vpack.c.b16 %v277, %v275
    %v390 = vpack.c.b16 %v280, %v278
    %v391 = vpack.c.b16 %v281, %v279
    %v392 = vpack.c.b16 %v284, %v282
    %v393 = vpack.c.b16 %v285, %v283
    %v394 = vpack.c.b16 %v288, %v286
    %v395 = vpack.c.b16 %v289, %v287
    %v396 = vpack.c.b16 %v292, %v290
    %v397 = vpack.c.b16 %v293, %v291
    %v398 = vpack.c.b16 %v296, %v294
    %v399 = vpack.c.b16 %v297, %v295
    %v400 = vpack.c.b16 %v300, %v298
    %v401 = vpack.c.b16 %v301, %v299
    %v402 = vpack.c.b16 %v304, %v302
    %v403 = vpack.c.b16 %v305, %v303
    %v404 = vpack.c.b16 %v308, %v306
    %v405 = vpack.c.b16 %v309, %v307
    %v406 = vpack.c.b16 %v312, %v310
    %v407 = vpack.c.b16 %v313, %v311
    %v408 = vpack.c.b16 %v316, %v314
    %v409 = vpack.c.b16 %v317, %v315
    %v410 = vpack.c.b16 %v320, %v318
    %v411 = vpack.c.b16 %v321, %v319
    %v412 = vpack.c.b16 %v324, %v322
    %v413 = vpack.c.b16 %v325, %v323
    %v414 = vpack.c.b16 %v328, %v326
    %v415 = vpack.c.b16 %v329, %v327
    %v416 = vpack.c.b16 %v332, %v330
    %v417 = vpack.c.b16 %v333, %v331
    %v418 = vpack.c.b16 %v336, %v334
    %v419 = vpack.c.b16 %v337, %v335
    %v420 = vpack.c.b16 %v340, %v338
    %v421 = vpack.c.b16 %v341, %v339
    %v422 = vpack.c.b16 %v344, %v342
    %v423 = vpack.c.b16 %v345, %v343
    %v424 = vpack.c.b16 %v348, %v346
    %v425 = vpack.c.b16 %v349, %v347
    %v426 = vpack.c.b16 %v352, %v350
    %v427 = vpack.c.b16 %v353, %v351
    %v428 = vpack.c.b16 %v356, %v354
    %v429 = vpack.c.b16 %v357, %v355
    %v430 = vpack.c.b16 %v360, %v358
    %v431 = vpack.c.b16 %v361, %v359
    %v432 = vpack.c.b16 %v364, %v362
    %v433 = vpack.c.b16 %v365, %v363
    %v434 = vpack.c.b16 %v368, %v366
    %v435 = vpack.c.b16 %v369, %v367
    %v436 = vpack.c.b16 %v372, %v370
    %v437 = vpack.c.b16 %v373, %v371
    %502 = vmatprep.subr.bf16.mxu0 %v389
    %503 = vmatpush1.bf16.msra.mxu0 %v388
    %504 = vmatprep.subr.bf16.mxu0 %v387
    %505 = vmatpush1.bf16.msra.mxu0 %v386
    %506 = vmatprep.subr.bf16.mxu0 %v385
    %507 = vmatpush1.bf16.msra.mxu0 %v384
    %508 = vmatprep.subr.bf16.mxu0 %v383
    %509 = vmatpush1.bf16.msra.mxu0 %v382
    %510 = vmatprep.subr.bf16.mxu0 %v381
    %511 = vmatpush1.bf16.msra.mxu0 %v380
    %512 = vmatprep.subr.bf16.mxu0 %v379
    %513 = vmatpush1.bf16.msra.mxu0 %v378
    %514 = vmatprep.subr.bf16.mxu0 %v377
    %515 = vmatpush1.bf16.msra.mxu0 %v376
    %516 = vmatprep.subr.bf16.mxu0 %v375
    %517 = vmatpush1.bf16.msra.mxu0 %v374
    %518 = vmatprep.subr.bf16.mxu0 %v405
    %519 = vmatpush2.bf16.msra.mxu0 %v404
    %520 = vmatprep.subr.bf16.mxu0 %v403
    %521 = vmatpush2.bf16.msra.mxu0 %v402
    %522 = vmatprep.subr.bf16.mxu0 %v401
    %523 = vmatpush2.bf16.msra.mxu0 %v400
    %524 = vmatprep.subr.bf16.mxu0 %v399
    %525 = vmatpush2.bf16.msra.mxu0 %v398
    %526 = vmatprep.subr.bf16.mxu0 %v397
    %527 = vmatpush2.bf16.msra.mxu0 %v396
    %528 = vmatprep.subr.bf16.mxu0 %v395
    %529 = vmatpush2.bf16.msra.mxu0 %v394
    %530 = vmatprep.subr.bf16.mxu0 %v393
    %531 = vmatpush2.bf16.msra.mxu0 %v392
    %532 = vmatprep.subr.bf16.mxu0 %v391
    %533 = vmatpush2.bf16.msra.mxu0 %v390
    %534 = vmatprep.mubr.bf16.mxu0 %v103
    %535 = vmatmul.mubr.bf16.gmra.mxu0 %v102
    %v536 = vpop.f32.mrf.mxu0
    %v537 = vadd.f32 %v175, %v536
    %v538 = vpop.f32.mrf.mxu0
    %v539 = vadd.f32 %v179, %v538
    %v540 = vpop.f32.mrf.mxu0
    %v541 = vadd.f32 %v175, %v540
    %v542 = vpop.f32.mrf.mxu0
    %v543 = vadd.f32 %v179, %v542
    %544 = vdwg.mxu0
    %545 = vmatprep.subr.bf16.mxu0 %v421
    %546 = vmatpush1.bf16.msra.mxu0 %v420
    %547 = vmatprep.subr.bf16.mxu0 %v419
    %548 = vmatpush1.bf16.msra.mxu0 %v418
    %549 = vmatprep.subr.bf16.mxu0 %v417
    %550 = vmatpush1.bf16.msra.mxu0 %v416
    %551 = vmatprep.subr.bf16.mxu0 %v415
    %552 = vmatpush1.bf16.msra.mxu0 %v414
    %553 = vmatprep.subr.bf16.mxu0 %v413
    %554 = vmatpush1.bf16.msra.mxu0 %v412
    %555 = vmatprep.subr.bf16.mxu0 %v411
    %556 = vmatpush1.bf16.msra.mxu0 %v410
    %557 = vmatprep.subr.bf16.mxu0 %v409
    %558 = vmatpush1.bf16.msra.mxu0 %v408
    %559 = vmatprep.subr.bf16.mxu0 %v407
    %560 = vmatpush1.bf16.msra.mxu0 %v406
    %561 = vmatprep.subr.bf16.mxu0 %v437
    %562 = vmatpush2.bf16.msra.mxu0 %v436
    %563 = vmatprep.subr.bf16.mxu0 %v435
    %564 = vmatpush2.bf16.msra.mxu0 %v434
    %565 = vmatprep.subr.bf16.mxu0 %v433
    %566 = vmatpush2.bf16.msra.mxu0 %v432
    %567 = vmatprep.subr.bf16.mxu0 %v431
    %568 = vmatpush2.bf16.msra.mxu0 %v430
    %569 = vmatprep.subr.bf16.mxu0 %v429
    %570 = vmatpush2.bf16.msra.mxu0 %v428
    %571 = vmatprep.subr.bf16.mxu0 %v427
    %572 = vmatpush2.bf16.msra.mxu0 %v426
    %573 = vmatprep.subr.bf16.mxu0 %v425
    %574 = vmatpush2.bf16.msra.mxu0 %v424
    %575 = vmatprep.subr.bf16.mxu0 %v423
    %576 = vmatpush2.bf16.msra.mxu0 %v422
    %577 = vmatprep.mubr.bf16.mxu0 %v105
    %578 = vmatmul.mubr.bf16.gmra.mxu0 %v104
    %v579 = vpop.f32.mrf.mxu0
    %v580 = vadd.f32 %v537, %v579
    %v581 = vpop.f32.mrf.mxu0
    %v582 = vadd.f32 %v539, %v581
    %v583 = vpop.f32.mrf.mxu0
    %v584 = vadd.f32 %v541, %v583
    %v585 = vpop.f32.mrf.mxu0
    %v586 = vadd.f32 %v543, %v585
    %587 = vdwg.mxu0
    %v588 = vmax.f32 %v580, 0.0
    %v589 = vmax.f32 %v582, 0.0
    %v590 = vmax.f32 %v584, 0.0
    %v591 = vmax.f32 %v586, 0.0
    %v592 = vpack.c.bf16 %v590, %v588
    %v593 = vpack.c.bf16 %v591, %v589
    %v594 = vld [vmem:[#allocation8] sm:$0xf]
    %v595 = vld [vmem:[#allocation8 + $0x4] sm:$0xf]
    %v596 = vld [vmem:[#allocation8 + $0x8] sm:$0xf]
    %v597 = vld [vmem:[#allocation8 + $0xc] sm:$0xf]
    %v598 = vld [vmem:[#allocation8 + $0x10] sm:$0xf]
    %v599 = vld [vmem:[#allocation8 + $0x14] sm:$0xf]
    %v600 = vld [vmem:[#allocation8 + $0x18] sm:$0xf]
    %v601 = vld [vmem:[#allocation8 + $0x1c] sm:$0xf]
    %v602 = vld [vmem:[#allocation8 + $0x20] sm:$0xf]
    %v603 = vld [vmem:[#allocation8 + $0x24] sm:$0xf]
    %v604 = vld [vmem:[#allocation8 + $0x28] sm:$0xf]
    %v605 = vld [vmem:[#allocation8 + $0x2c] sm:$0xf]
    %v606 = vld [vmem:[#allocation8 + $0x30] sm:$0xf]
    %v607 = vld [vmem:[#allocation8 + $0x34] sm:$0xf]
    %v608 = vld [vmem:[#allocation8 + $0x38] sm:$0xf]
    %v609 = vld [vmem:[#allocation8 + $0x3c] sm:$0xf]
    %v610 = vld [vmem:[#allocation8 + $0x40] sm:$0xf]
    %v611 = vld [vmem:[#allocation8 + $0x44] sm:$0xf]
    %v612 = vld [vmem:[#allocation8 + $0x48] sm:$0xf]
    %v613 = vld [vmem:[#allocation8 + $0x4c] sm:$0xf]
    %v614 = vld [vmem:[#allocation8 + $0x50] sm:$0xf]
    %v615 = vld [vmem:[#allocation8 + $0x54] sm:$0xf]
    %v616 = vld [vmem:[#allocation8 + $0x58] sm:$0xf]
    %v617 = vld [vmem:[#allocation8 + $0x5c] sm:$0xf]
    %v618 = vld [vmem:[#allocation8 + $0x60] sm:$0xf]
    %v619 = vld [vmem:[#allocation8 + $0x64] sm:$0xf]
    %v620 = vld [vmem:[#allocation8 + $0x68] sm:$0xf]
    %v621 = vld [vmem:[#allocation8 + $0x6c] sm:$0xf]
    %v622 = vld [vmem:[#allocation8 + $0x70] sm:$0xf]
    %v623 = vld [vmem:[#allocation8 + $0x74] sm:$0xf]
    %v624 = vld [vmem:[#allocation8 + $0x78] sm:$0xf]
    %v625 = vld [vmem:[#allocation8 + $0x7c] sm:$0xf]
    %v626 = vld [vmem:[%s4] sm:$0x1]
    %v628 = vlaneseq
    %v629 = vshrl.u32 %v628, 7
    %v630 = vsub.s32 0, %v629
    %v631 = vrot.slane %v626, %v630
    %v665 = vunpack.c.l.b16 %v594
    %v666 = vunpack.c.l.b16 %v595
    %v667 = vunpack.c.l.b16 %v596
    %v668 = vunpack.c.l.b16 %v597
    %v669 = vunpack.c.l.b16 %v598
    %v670 = vunpack.c.l.b16 %v599
    %v671 = vunpack.c.l.b16 %v600
    %v672 = vunpack.c.l.b16 %v601
    %v673 = vunpack.c.l.b16 %v602
    %v674 = vunpack.c.l.b16 %v603
    %v675 = vunpack.c.l.b16 %v604
    %v676 = vunpack.c.l.b16 %v605
    %v677 = vunpack.c.l.b16 %v606
    %v678 = vunpack.c.l.b16 %v607
    %v679 = vunpack.c.l.b16 %v608
    %v680 = vunpack.c.l.b16 %v609
    %v681 = vunpack.c.l.b16 %v610
    %v682 = vunpack.c.l.b16 %v611
    %v683 = vunpack.c.l.b16 %v612
    %v684 = vunpack.c.l.b16 %v613
    %v685 = vunpack.c.l.b16 %v614
    %v686 = vunpack.c.l.b16 %v615
    %v687 = vunpack.c.l.b16 %v616
    %v688 = vunpack.c.l.b16 %v617
    %v689 = vunpack.c.l.b16 %v618
    %v690 = vunpack.c.l.b16 %v619
    %v691 = vunpack.c.l.b16 %v620
    %v692 = vunpack.c.l.b16 %v621
    %v693 = vunpack.c.l.b16 %v622
    %v694 = vunpack.c.l.b16 %v623
    %v695 = vunpack.c.l.b16 %v624
    %v696 = vunpack.c.l.b16 %v625
    %v697 = vpack.c.b16 %v666, %v665
    %v698 = vpack.c.b16 %v668, %v667
    %v699 = vpack.c.b16 %v670, %v669
    %v700 = vpack.c.b16 %v672, %v671
    %v701 = vpack.c.b16 %v674, %v673
    %v702 = vpack.c.b16 %v676, %v675
    %v703 = vpack.c.b16 %v678, %v677
    %v704 = vpack.c.b16 %v680, %v679
    %v705 = vpack.c.b16 %v682, %v681
    %v706 = vpack.c.b16 %v684, %v683
    %v707 = vpack.c.b16 %v686, %v685
    %v708 = vpack.c.b16 %v688, %v687
    %v709 = vpack.c.b16 %v690, %v689
    %v710 = vpack.c.b16 %v692, %v691
    %v711 = vpack.c.b16 %v694, %v693
    %v712 = vpack.c.b16 %v696, %v695
    %729 = vmatprep.subr.bf16.mxu0 0
    %730 = vmatpush1.bf16.msra.mxu0 %v704
    %731 = vmatprep.subr.bf16.mxu0 0
    %732 = vmatpush1.bf16.msra.mxu0 %v703
    %733 = vmatprep.subr.bf16.mxu0 0
    %734 = vmatpush1.bf16.msra.mxu0 %v702
    %735 = vmatprep.subr.bf16.mxu0 0
    %736 = vmatpush1.bf16.msra.mxu0 %v701
    %737 = vmatprep.subr.bf16.mxu0 0
    %738 = vmatpush1.bf16.msra.mxu0 %v700
    %739 = vmatprep.subr.bf16.mxu0 0
    %740 = vmatpush1.bf16.msra.mxu0 %v699
    %741 = vmatprep.subr.bf16.mxu0 0
    %742 = vmatpush1.bf16.msra.mxu0 %v698
    %743 = vmatprep.subr.bf16.mxu0 0
    %744 = vmatpush1.bf16.msra.mxu0 %v697
    %745 = vmatprep.subr.bf16.mxu0 0
    %746 = vmatpush2.bf16.msra.mxu0 %v712
    %747 = vmatprep.subr.bf16.mxu0 0
    %748 = vmatpush2.bf16.msra.mxu0 %v711
    %749 = vmatprep.subr.bf16.mxu0 0
    %750 = vmatpush2.bf16.msra.mxu0 %v710
    %751 = vmatprep.subr.bf16.mxu0 0
    %752 = vmatpush2.bf16.msra.mxu0 %v709
    %753 = vmatprep.subr.bf16.mxu0 0
    %754 = vmatpush2.bf16.msra.mxu0 %v708
    %755 = vmatprep.subr.bf16.mxu0 0
    %756 = vmatpush2.bf16.msra.mxu0 %v707
    %757 = vmatprep.subr.bf16.mxu0 0
    %758 = vmatpush2.bf16.msra.mxu0 %v706
    %759 = vmatprep.subr.bf16.mxu0 0
    %760 = vmatpush2.bf16.msra.mxu0 %v705
    %761 = vmatprep.mubr.bf16.mxu0 %v593
    %762 = vmatmul.mubr.bf16.gmra.mxu0 %v592
    %v763 = vpop.f32.mrf.mxu0
    %v764 = vadd.f32 %v631, %v763
    %v765 = vpop.f32.mrf.mxu0
    %v766 = vpop.f32.mrf.mxu0
    %v767 = vadd.f32 %v631, %v766
    %v768 = vpop.f32.mrf.mxu0
    %769 = vdwg.mxu0
    %v770 = vmax.f32 %v764, 0.0
    %v771 = vmax.f32 %v767, 0.0
    %v772 = vpack.c.bf16 %v771, %v770
    %v773 = vld [vmem:[#allocation10] sm:$0xf]
    %v774 = vld [vmem:[#allocation10 + $0x4] sm:$0xf]
    %v775 = vld [vmem:[#allocation10 + $0x8] sm:$0xf]
    %v776 = vld [vmem:[#allocation10 + $0xc] sm:$0xf]
    %v777 = vld [vmem:[#allocation10 + $0x10] sm:$0xf]
    %v778 = vld [vmem:[#allocation10 + $0x14] sm:$0xf]
    %v779 = vld [vmem:[#allocation10 + $0x18] sm:$0xf]
    %v780 = vld [vmem:[#allocation10 + $0x1c] sm:$0xf]
    %v781 = vld [vmem:[#allocation10 + $0x20] sm:$0xf]
    %v782 = vld [vmem:[#allocation10 + $0x24] sm:$0xf]
    %v783 = vld [vmem:[#allocation10 + $0x28] sm:$0xf]
    %v784 = vld [vmem:[#allocation10 + $0x2c] sm:$0xf]
    %v785 = vld [vmem:[#allocation10 + $0x30] sm:$0xf]
    %v786 = vld [vmem:[#allocation10 + $0x34] sm:$0xf]
    %v787 = vld [vmem:[#allocation10 + $0x38] sm:$0xf]
    %v788 = vld [vmem:[#allocation10 + $0x3c] sm:$0xf]
    %v789 = vld [vmem:[%s6] sm:$0x1]
    %v791 = vlaneseq
    %v792 = vshrl.u32 %v791, 7
    %v793 = vsub.s32 0, %v792
    %v794 = vrot.slane %v789, %v793
    %v812 = vunpack.c.l.b16 %v773
    %v813 = vunpack.c.l.b16 %v774
    %v814 = vunpack.c.l.b16 %v775
    %v815 = vunpack.c.l.b16 %v776
    %v816 = vunpack.c.l.b16 %v777
    %v817 = vunpack.c.l.b16 %v778
    %v818 = vunpack.c.l.b16 %v779
    %v819 = vunpack.c.l.b16 %v780
    %v820 = vunpack.c.l.b16 %v781
    %v821 = vunpack.c.l.b16 %v782
    %v822 = vunpack.c.l.b16 %v783
    %v823 = vunpack.c.l.b16 %v784
    %v824 = vunpack.c.l.b16 %v785
    %v825 = vunpack.c.l.b16 %v786
    %v826 = vunpack.c.l.b16 %v787
    %v827 = vunpack.c.l.b16 %v788
    %v828 = vpack.c.b16 %v813, %v812
    %v829 = vpack.c.b16 %v815, %v814
    %v830 = vpack.c.b16 %v817, %v816
    %v831 = vpack.c.b16 %v819, %v818
    %v832 = vpack.c.b16 %v821, %v820
    %v833 = vpack.c.b16 %v823, %v822
    %v834 = vpack.c.b16 %v825, %v824
    %v835 = vpack.c.b16 %v827, %v826
    %844 = vmatprep.subr.bf16.mxu0 0
    %845 = vmatpush1.bf16.msra.mxu0 %v835
    %846 = vmatprep.subr.bf16.mxu0 0
    %847 = vmatpush1.bf16.msra.mxu0 %v834
    %848 = vmatprep.subr.bf16.mxu0 0
    %849 = vmatpush1.bf16.msra.mxu0 %v833
    %850 = vmatprep.subr.bf16.mxu0 0
    %851 = vmatpush1.bf16.msra.mxu0 %v832
    %852 = vmatprep.subr.bf16.mxu0 0
    %853 = vmatpush1.bf16.msra.mxu0 %v831
    %854 = vmatprep.subr.bf16.mxu0 0
    %855 = vmatpush1.bf16.msra.mxu0 %v830
    %856 = vmatprep.subr.bf16.mxu0 0
    %857 = vmatpush1.bf16.msra.mxu0 %v829
    %858 = vmatprep.subr.bf16.mxu0 0
    %859 = vmatpush1.bf16.msra.mxu0 %v828
    %860 = vmatprep.subr.bf16.mxu0 0
    %861 = vmatpush2.bf16.msra.mxu0 0
    %862 = vmatprep.subr.bf16.mxu0 0
    %863 = vmatpush2.bf16.msra.mxu0 0
    %864 = vmatprep.subr.bf16.mxu0 0
    %865 = vmatpush2.bf16.msra.mxu0 0
    %866 = vmatprep.subr.bf16.mxu0 0
    %867 = vmatpush2.bf16.msra.mxu0 0
    %868 = vmatprep.subr.bf16.mxu0 0
    %869 = vmatpush2.bf16.msra.mxu0 0
    %870 = vmatprep.subr.bf16.mxu0 0
    %871 = vmatpush2.bf16.msra.mxu0 0
    %872 = vmatprep.subr.bf16.mxu0 0
    %873 = vmatpush2.bf16.msra.mxu0 0
    %874 = vmatprep.subr.bf16.mxu0 0
    %875 = vmatpush2.bf16.msra.mxu0 0
    %876 = vmatprep.mubr.bf16.mxu0 0
    %877 = vmatmul.mubr.bf16.gmra.mxu0 %v772
    %v878 = vpop.f32.mrf.mxu0
    %v879 = vadd.f32 %v794, %v878
    %v880 = vpop.f32.mrf.mxu0
    %v881 = vpop.f32.mrf.mxu0
    %v882 = vadd.f32 %v794, %v881
    %v883 = vpop.f32.mrf.mxu0
    %884 = vdwg.mxu0
    %885 = vst [vmem:[#allocation11] sm:$0xff] %v879
    %886 = vst [vmem:[#allocation11 + $0x8] sm:$0xff] %v882
    // Predicated region
    $region50: #{_forward_jit.1} parent=1 // pred_check
      _
    $region51: #{_forward_jit.1} parent=1 // pred_check_branch
      %888 = sbr.rel (0) target = $region53
    $region52: #{_forward_jit.1} parent=1 // pred_region
      %s890 = ssub.s32 256, 256
      %891 = vsyncadd [#allocation4], %s890
      %s892 = sshll.u32 [#allocation11], 4
      %s893 = int_to_ptr.vmem [resolvable:$true] %s892
      %898 = dma.vmem_to_hbm [thread:$0]  %s893, 256, %s7, [#allocation4], 128, 128, 8
    $region53: #{_forward_jit.1} parent=1 // pred_fallthru
      _
    // Predicated region
    $region54: #{_forward_jit.1} parent=1 // pred_check
      _
    $region55: #{_forward_jit.1} parent=1 // pred_check_branch
      %900 = sbr.rel (0) target = $region57
    $region56: #{_forward_jit.1} parent=1 // pred_region
      %901 = dma.done [#allocation4], 256
    $region57: #{_forward_jit.1} parent=1 // pred_fallthru
      _
    %902 = vsyncpa [#allocation3], 1
    %903 = vsyncpa [#allocation6], 1
    %904 = vsyncpa [#allocation9], 1
    %905 = vsyncpa [#allocation4], 1

</llo_original>
